<compile_context>
chip_gen: v5e
topology: v5e:2x2
jax: 0.10.0
libtpu: 0.0.40
codegen_flags: <defaults>
</compile_context>

<pallas_src>
import jax
import jax.numpy as jnp
from jax.experimental import pallas as pl
from jax.experimental.pallas import tpu as pltpu

LANE_W = 512                          # lane-dense last dim (multiple of 128)
TARGET_BLOCK_PARAM_BYTES = 4 << 20    # ~4 MiB of parameter bytes per grid step
MIN_GRID_STEPS = 4                    # megacore sharding + pipeline depth
SMALL_FALLBACK_ELEMS = 65536          # below this a fused jnp op beats pallas_call


def _round_up(x: int, m: int) -> int:
    return (x + m - 1) // m * m


def _visible_mask_kernel(task_id_ref, param_ref, alloc_ref, out_ref):
    """out = param * (alloc <= task_id) on one (block_rows, LANE_W) tile."""
    task_id = task_id_ref[0]                              # int32 scalar (SMEM)
    # Note(review): a pure-uint8 compare would skip this 8->32 unpack, but
    # unsigned-8 vector compares are a lowering risk and the VPU is idle in
    # this DMA-bound kernel, so the in-register widen is kept (it is free —
    # the uint8 never travels wide through HBM).
    mask = alloc_ref[...].astype(jnp.int32) <= task_id
    p = param_ref[...]
    # Multiply (not jnp.where) so NaN/Inf in pruned slots behave exactly like
    # the PyTorch semantics (NaN * 0 == NaN).
    out_ref[...] = p * mask.astype(p.dtype)


def _jnp_forward(parameter, allocation, task_id):
    """Fused XLA elementwise path (HBM roofline, zero extra copies)."""
    mask = allocation.astype(jnp.int32) <= task_id
    return (parameter.reshape(-1) * mask.astype(parameter.dtype)).reshape(parameter.shape)


def prunable_parameter_forward(parameter: jax.Array,
                               allocation: jax.Array,
                               task_id: int,
                               *,
                               min_pallas_elems: int = SMALL_FALLBACK_ELEMS) -> jax.Array:
    """JAX/Pallas equivalent of PrunableParameter.forward(task_id).

    parameter : any-shape float array (the nn.Parameter), native dtype kept
    allocation: uint8 array with parameter.size elements (task allocation)
    task_id   : python int / scalar
    """
    if allocation.dtype != jnp.uint8:
        raise TypeError(f"allocation must be uint8, got {allocation.dtype}")
    if allocation.size != parameter.size:
        raise ValueError(
            f"allocation.size ({allocation.size}) != parameter.size ({parameter.size})")

    n = parameter.size
    dtype = parameter.dtype
    orig_shape = parameter.shape

    # (1) Small parameters (biases etc.): pallas_call fixed overhead dominates;
    #     XLA fuses the jnp expression into neighbours for free.
    # (2) Ragged sizes (n % 512 != 0): any pad/slice/concat repack outside the
    #     custom call materializes extra full HBM passes (~3x traffic), while
    #     the fused elementwise op is already at the HBM roofline with zero
    #     extra copies — this replaces the previous pad/unpad path entirely.
    if n < min_pallas_elems or n % LANE_W != 0:
        return _jnp_forward(parameter, allocation, task_id)

    n_rows = n // LANE_W
    itemsize = int(jnp.dtype(dtype).itemsize)

    # Dtype-scaled blocks: ~4 MiB of parameter bytes per grid step, capped so
    # the grid has >= MIN_GRID_STEPS steps (both v7x TCs get work, pipeline
    # stays deep), rounded to a multiple of 32 rows (native uint8 sublane tile).
    target_rows = max(256, TARGET_BLOCK_PARAM_BYTES // (LANE_W * itemsize))
    cap_rows = _round_up(pl.cdiv(n_rows, MIN_GRID_STEPS), 32)
    block_rows = min(target_rows, cap_rows)
    block_rows = max(32, (block_rows // 32) * 32)
    block_rows = min(block_rows, n_rows)
    grid = (pl.cdiv(n_rows, block_rows),)      # partial trailing row-block is fine

    p2d = parameter.reshape(n_rows, LANE_W)    # bitcast views, no HBM copies
    a2d = allocation.reshape(n_rows, LANE_W)
    task_id_arr = jnp.asarray([task_id], dtype=jnp.int32)

    cost = pl.CostEstimate(
        flops=2 * n,                                 # compare + multiply per element
        transcendentals=0,
        bytes_accessed=n * (2 * itemsize + 1),       # param in + out, alloc in
    )

    out2d = pl.pallas_call(
        _visible_mask_kernel,
        out_shape=jax.ShapeDtypeStruct((n_rows, LANE_W), dtype),
        grid_spec=pltpu.PrefetchScalarGridSpec(
            num_scalar_prefetch=1,                   # task_id lives in SMEM
            grid=grid,
            in_specs=[
                pl.BlockSpec((block_rows, LANE_W), lambda i, tid: (i, 0)),
                pl.BlockSpec((block_rows, LANE_W), lambda i, tid: (i, 0)),
            ],
            out_specs=pl.BlockSpec((block_rows, LANE_W), lambda i, tid: (i, 0)),
        ),
        compiler_params=pltpu.CompilerParams(
            # TODO(synk): verify plain "parallel" shards the grid across v7x's
            # two TensorCores; switch to pltpu.CORE_PARALLEL if it does not.
            dimension_semantics=("parallel",),
            vmem_limit_bytes=40 * 1024 * 1024,       # DB working set ~20 MiB + headroom
        ),
        cost_estimate=cost,
    )(task_id_arr, p2d, a2d)

    return out2d.reshape(orig_shape)


def reference_forward(parameter, allocation, task_id):
    """Pure-JAX reference matching the PyTorch semantics (multiply by mask)."""
    mask = allocation.astype(jnp.int32) <= task_id
    return (parameter.reshape(-1) * mask.astype(parameter.dtype)).reshape(parameter.shape)


if __name__ == "__main__":
    key = jax.random.PRNGKey(0)
    k1p, k1a, k2p, k2a, k3p, k3a = jax.random.split(key, 6)

    # --- test 1: f32 conv-stack weight, size multiple of 512 -> Pallas path ---
    shape1 = (128, 64, 3, 3)                         # 73728 elements = 144 x 512 rows
    param1 = jax.random.normal(k1p, shape1, dtype=jnp.float32)
    alloc1 = jax.random.randint(k1a, (param1.size,), 0, 4, dtype=jnp.int32).astype(jnp.uint8)
    task_id = 2                                      # tasks 0,1,2 visible
    out1 = jax.block_until_ready(prunable_parameter_forward(param1, alloc1, task_id))
    ref1 = reference_forward(param1, alloc1, task_id)
    assert out1.shape == param1.shape and out1.dtype == param1.dtype
    assert jnp.allclose(out1, ref1), "Pallas kernel mismatch vs reference (test 1)"

    # --- test 2: bf16 linear weight -> Pallas path with dtype-scaled blocks ---
    shape2 = (256, 512)                              # 131072 elements
    param2 = jax.random.normal(k2p, shape2, dtype=jnp.bfloat16)
    alloc2 = jax.random.randint(k2a, (param2.size,), 0, 4, dtype=jnp.int32).astype(jnp.uint8)
    out2 = jax.block_until_ready(prunable_parameter_forward(param2, alloc2, 1))
    ref2 = reference_forward(param2, alloc2, 1)
    assert out2.shape == param2.shape and out2.dtype == param2.dtype
    assert jnp.allclose(out2.astype(jnp.float32), ref2.astype(jnp.float32)), \
        "Pallas kernel mismatch vs reference (test 2)"

    # --- test 3: small ragged bias-like tensor -> fused jnp fallback path -----
    shape3 = (3, 5, 7)                               # 105 elements, not multiple of 512
    param3 = jax.random.normal(k3p, shape3, dtype=jnp.float32)
    alloc3 = jax.random.randint(k3a, (param3.size,), 0, 4, dtype=jnp.int32).astype(jnp.uint8)
    out3 = jax.block_until_ready(prunable_parameter_forward(param3, alloc3, 1))
    ref3 = reference_forward(param3, alloc3, 1)
    assert out3.shape == param3.shape and out3.dtype == param3.dtype
    assert jnp.allclose(out3, ref3), "Fallback path mismatch vs reference (test 3)"

    print("KERNEL_OK")
</pallas_src>

<mosaic_0001>
module attributes {stable_mosaic.version = 11 : i64} {
  func.func @_visible_mask_kernel(%arg0: i32, %arg1: memref<1xi32, #tpu.memory_space<smem>>, %arg2: memref<64x512xf32, #tpu.memory_space<vmem>>, %arg3: memref<64x512xi8, #tpu.memory_space<vmem>>, %arg4: memref<64x512xf32, #tpu.memory_space<vmem>>) attributes {dimension_semantics = [#tpu.dimension_semantics<parallel>], iteration_bounds = array<i64: 3>, scalar_prefetch = 1 : i64, scratch_operands = 0 : i64, tpu.core_type = #tpu.core_type<tc>, window_params = [{transform_indices = @transform_0, window_bounds = array<i64: 64, 512>}, {transform_indices = @transform_1, window_bounds = array<i64: 64, 512>}, {transform_indices = @transform_2, window_bounds = array<i64: 64, 512>}]} {
    %c0 = arith.constant 0 : index
    %0 = memref.load %arg1[%c0] : memref<1xi32, #tpu.memory_space<smem>>
    %c0_0 = arith.constant 0 : index
    %c0_1 = arith.constant 0 : index
    %1 = vector.load %arg3[%c0_0, %c0_1] : memref<64x512xi8, #tpu.memory_space<vmem>>, vector<64x512xi8>
    %2 = arith.extui %1 : vector<64x512xi8> to vector<64x512xi32>
    %3 = vector.broadcast %0 : i32 to vector<64x512xi32>
    %4 = arith.cmpi sle, %2, %3 : vector<64x512xi32>
    %c0_2 = arith.constant 0 : index
    %c0_3 = arith.constant 0 : index
    %5 = vector.load %arg2[%c0_2, %c0_3] : memref<64x512xf32, #tpu.memory_space<vmem>>, vector<64x512xf32>
    %6 = arith.extui %4 : vector<64x512xi1> to vector<64x512xi32>
    %7 = arith.sitofp %6 : vector<64x512xi32> to vector<64x512xf32>
    %8 = arith.mulf %5, %7 : vector<64x512xf32>
    %c0_4 = arith.constant 0 : index
    %c0_5 = arith.constant 0 : index
    %9 = vector.load %arg4[%c0_4, %c0_5] : memref<64x512xf32, #tpu.memory_space<vmem>>, vector<64x512xf32>
    tpu.vector_store %arg4[%c0_4, %c0_5], %8 {strides = array<i32>} : memref<64x512xf32, #tpu.memory_space<vmem>>, vector<64x512xf32>,
    return
  }
  func.func @transform_0(%arg0: i32, %arg1: memref<1xi32, #tpu.memory_space<smem>>) -> (i32, i32) {
    %c0_i32 = arith.constant 0 : i32
    %c0_i32_0 = arith.constant 0 : i32
    return %arg0, %c0_i32 : i32, i32
  }
  func.func @transform_1(%arg0: i32, %arg1: memref<1xi32, #tpu.memory_space<smem>>) -> (i32, i32) {
    %c0_i32 = arith.constant 0 : i32
    %c0_i32_0 = arith.constant 0 : i32
    return %arg0, %c0_i32 : i32, i32
  }
  func.func @transform_2(%arg0: i32, %arg1: memref<1xi32, #tpu.memory_space<smem>>) -> (i32, i32) {
    %c0_i32 = arith.constant 0 : i32
    %c0_i32_0 = arith.constant 0 : i32
    return %arg0, %c0_i32 : i32, i32
  }
}

</mosaic_0001>

<llo_original>
// kernel: tpu_custom_call.1
$region0: #{tpu_custom_call.1}
  #allocation0 [shape = 'u32[]', space=smem, size = 0x4, offset = 0x4, fixed_abs, tag = 'smem constant byte address 0x4 - core index']
  #allocation1 [shape = 'u32[72,128]{1,0:T(1,128)}', space=vmem, size = 0x9000, scoped, tag = 'internal scratch']
  #allocation2 [shape = 's32[1]{0}', space=sflag, size = 0x4, scoped, tag = 'scoped memory for tpu_custom_call.1']
  #allocation3 [shape = 's32[1]{0:T(128)S(6)}', space=smem, size = 0x200, scoped, tag = 'prefetched SMEM operand 0']
  %s0 = inlined_call_operand.<no memory space> [shape: s32[1], index: 0, kind: input, shape index: {}]
  %s1 = inlined_call_operand.hbm [shape: f32[144,512], index: 1, kind: input, shape index: {}]
  %s2 = inlined_call_operand.hbm [shape: u8[144,512], index: 2, kind: input, shape index: {}]
  %s3 = inlined_call_operand.hbm [shape: f32[144,512], index: 3, kind: output, shape index: {}]
  %s4 = sld [smem:[#allocation0]]
  $region49: #{tpu_custom_call.1} parent=0
    _
  %s6 = ssub.s32 1, %s4
  %s7 = scalar_select 0, %s6, %s4
  %8 = sst [smem:[#allocation3]] %s0
  $region1: #{tpu_custom_call.1} parent=0
    #allocation4 [shape = 'u8[262144]{0}', space=vmem, size = 0x40000, scoped, tag = 'input window, operand 1']
    #allocation5 [shape = 's32[2]{0}', space=sflag, size = 0x8, scoped, tag = 'scoped memory for tpu_custom_call.1']
    #allocation6 [shape = 's32[2]{0}', space=sflag, size = 0x8, scoped, tag = 'scoped memory for tpu_custom_call.1']
    #allocation7 [shape = 'u8[65536]{0}', space=vmem, size = 0x10000, scoped, tag = 'input window, operand 2']
    #allocation8 [shape = 's32[2]{0}', space=sflag, size = 0x8, scoped, tag = 'scoped memory for tpu_custom_call.1']
    #allocation9 [shape = 'u8[262144]{0}', space=vmem, size = 0x40000, scoped, tag = 'output window, operand 0']
    %9 = vsyncpa [#allocation5], 0
    %s10 = scalar_lea.sflag [#allocation5], 1
    %11 = vsyncpa %s10, 0
    %12 = vsyncpa [#allocation8], 0
    %s13 = scalar_lea.sflag [#allocation8], 1
    %14 = vsyncpa %s13, 0
    %15 = vsyncpa [#allocation6], 0
    %s16 = scalar_lea.sflag [#allocation6], 1
    %17 = vsyncpa %s16, 0
    loop: start=0, step=1, limit=5
    $region2: #{tpu_custom_call.1} parent=1 // loop_pre_header
      _
    $region3: #{tpu_custom_call.1} parent=1 // loop_header
      %s19 = sphi 0, %s23
      %p20 = scmp.ge.s32.totalorder %s19, 5
      %s29 = sphi 0, %s31
      %s32 = sphi 0, %s29
      %s33 = sphi 0, %s32
      %s49 = sphi 0, %s33
      %s55 = sphi 0, %s57
      %s58 = sphi 0, %s55
      %s59 = sphi 0, %s58
      %s75 = sphi 0, %s59
      %s81 = sphi 0, %s83
      %s84 = sphi 0, %s81
      %s85 = sphi 0, %s84
      %s101 = sphi 0, %s85
    $region4: #{tpu_custom_call.1} parent=1 // loop_header_branch
      %22 = sbr.rel (%p20) target = $region8
    $region5: #{tpu_custom_call.1} parent=1 // loop_body
      %s24 = ssub.s32 %s19, 1
      %s25 = ssub.s32 %s19, 2
      %s26 = sadd.s32 %s19, 1
      %s27 = ssub.s32 %s19, %s26
      %p28 = scmp.eq.s32.totalorder %s27, 0
      %s30 = sadd.s32 %s29, 1
      %s31 = scalar_select %p28, %s29, %s30
      %p34 = pneg %p28
      %p35 = scmp.eq.s32.totalorder %s19, 2
      %p36 = por %p34, %p35
      %p37 = scmp.ne.s32.totalorder %s29, %s32
      %p38 = scmp.eq.s32.totalorder %s19, 0
      %p39 = por %p37, %p38
      %p40 = scmp.ne.s32.totalorder %s29, %s32
      %p41 = scmp.eq.s32.totalorder %s24, 2
      %p42 = por %p40, %p41
      %p43 = scmp.ne.s32.totalorder %s32, %s33
      %p44 = scmp.eq.s32.totalorder %s24, 0
      %p45 = por %p43, %p44
      %p46 = scmp.ne.s32.totalorder %s32, %s33
      %p47 = scmp.eq.s32.totalorder %s25, 2
      %p48 = por %p46, %p47
      %p50 = scmp.ne.s32.totalorder %s33, %s49
      %p51 = scmp.eq.s32.totalorder %s25, 0
      %p52 = por %p50, %p51
      %s53 = ssub.s32 %s19, %s26
      %p54 = scmp.eq.s32.totalorder %s53, 0
      %s56 = sadd.s32 %s55, 1
      %s57 = scalar_select %p54, %s55, %s56
      %p60 = pneg %p54
      %p61 = scmp.eq.s32.totalorder %s19, 2
      %p62 = por %p60, %p61
      %p63 = scmp.ne.s32.totalorder %s55, %s58
      %p64 = scmp.eq.s32.totalorder %s19, 0
      %p65 = por %p63, %p64
      %p66 = scmp.ne.s32.totalorder %s55, %s58
      %p67 = scmp.eq.s32.totalorder %s24, 2
      %p68 = por %p66, %p67
      %p69 = scmp.ne.s32.totalorder %s58, %s59
      %p70 = scmp.eq.s32.totalorder %s24, 0
      %p71 = por %p69, %p70
      %p72 = scmp.ne.s32.totalorder %s58, %s59
      %p73 = scmp.eq.s32.totalorder %s25, 2
      %p74 = por %p72, %p73
      %p76 = scmp.ne.s32.totalorder %s59, %s75
      %p77 = scmp.eq.s32.totalorder %s25, 0
      %p78 = por %p76, %p77
      %s79 = ssub.s32 %s19, %s26
      %p80 = scmp.eq.s32.totalorder %s79, 0
      %s82 = sadd.s32 %s81, 1
      %s83 = scalar_select %p80, %s81, %s82
      %p86 = pneg %p80
      %p87 = scmp.eq.s32.totalorder %s19, 2
      %p88 = por %p86, %p87
      %p89 = scmp.ne.s32.totalorder %s81, %s84
      %p90 = scmp.eq.s32.totalorder %s19, 0
      %p91 = por %p89, %p90
      %p92 = scmp.ne.s32.totalorder %s81, %s84
      %p93 = scmp.eq.s32.totalorder %s24, 2
      %p94 = por %p92, %p93
      %p95 = scmp.ne.s32.totalorder %s84, %s85
      %p96 = scmp.eq.s32.totalorder %s24, 0
      %p97 = por %p95, %p96
      %p98 = scmp.ne.s32.totalorder %s84, %s85
      %p99 = scmp.eq.s32.totalorder %s25, 2
      %p100 = por %p98, %p99
      %p102 = scmp.ne.s32.totalorder %s85, %s101
      %p103 = scmp.eq.s32.totalorder %s25, 0
      %p104 = por %p102, %p103
      %p105 = scmp.le.s32.totalorder 1, %s19
      %p106 = scmp.lt.s32.totalorder %s19, 4
      %p107 = pnand %p105, %p106
      %p108 = pneg %p107
      // Predicated region
      $region9: #{tpu_custom_call.1} parent=5 // pred_check
        _
      $region10: #{tpu_custom_call.1} parent=5 // pred_check_branch
        %110 = sbr.rel (%p107) target = $region12
      $region11: #{tpu_custom_call.1} parent=5 // pred_region
        %s111 = ssub.s32 %s19, 1
      $region12: #{tpu_custom_call.1} parent=5 // pred_fallthru
        _
      %p112 = scmp.lt.s32.totalorder %s19, 3
      // Predicated region
      $region13: #{tpu_custom_call.1} parent=5 // pred_check
        %p113 = pneg %p112
      $region14: #{tpu_custom_call.1} parent=5 // pred_check_branch
        %115 = sbr.rel (%p113) target = $region16
      $region15: #{tpu_custom_call.1} parent=5 // pred_region
        // Predicated region
        $region17: #{tpu_custom_call.1} parent=15 // pred_check
          %p116 = pneg %p39
        $region18: #{tpu_custom_call.1} parent=15 // pred_check_branch
          %118 = sbr.rel (%p116) target = $region20
        $region19: #{tpu_custom_call.1} parent=15 // pred_region
          %s119 = sand.u32 %s29, 1
          %s120 = scalar_lea.sflag [#allocation5], %s119
          %s121 = sand.u32 %s29, 1
          %s122 = smul.addr %s121, 256
          %s123 = scalar_lea.vmem [#allocation4], %s122
          %s124 = smul.u32 8, %s19
          %s125 = ssub.s32 18, %s124
          %p126 = scmp.lt.s32.totalorder %s125, 8
          %s127 = scalar_select %p126, %s125, 8
          %s128 = smul.u32 8, %s127
          %s129 = smul.u32 %s128, 4
          %s130 = ssub.s32 256, %s129
          %s131 = sshll.u32 %s130, 4
          %132 = vsyncadd %s120, %s131
          %p133 = scmp.ne.s32.totalorder 0, %s129
          %s134 = smul.addr %s124, 4
          %s135 = smul.addr %s134, 8
          %s136 = scalar_lea.hbm %s1, %s135
          %s137 = smul.u32 32, %s127
          %s138 = sshll.u32 %s136, 4
          %s139 = int_to_ptr.hbm [resolvable:$true] %s138
          %s140 = sshll.u32 %s123, 4
          %s141 = int_to_ptr.vmem [resolvable:$true] %s140
          %s142 = sshll.u32 %s137, 4
          %146 = dma.hbm_to_vmem [thread:$0]  (%p133), %s139, %s142, %s141, %s120, 512, 512, 32
        $region20: #{tpu_custom_call.1} parent=15 // pred_fallthru
          _
        // Predicated region
        $region21: #{tpu_custom_call.1} parent=15 // pred_check
          %p147 = pneg %p65
        $region22: #{tpu_custom_call.1} parent=15 // pred_check_branch
          %149 = sbr.rel (%p147) target = $region24
        $region23: #{tpu_custom_call.1} parent=15 // pred_region
          %s150 = sand.u32 %s55, 1
          %s151 = scalar_lea.sflag [#allocation8], %s150
          %s152 = sand.u32 %s55, 1
          %s153 = smul.addr %s152, 64
          %s154 = scalar_lea.vmem [#allocation7], %s153
          %s155 = smul.u32 8, %s19
          %s156 = ssub.s32 18, %s155
          %p157 = scmp.lt.s32.totalorder %s156, 8
          %s158 = scalar_select %p157, %s156, 8
          %s159 = smul.u32 2, %s158
          %s160 = smul.u32 %s159, 4
          %s161 = ssub.s32 64, %s160
          %s162 = sshll.u32 %s161, 4
          %163 = vsyncadd %s151, %s162
          %p164 = scmp.ne.s32.totalorder 0, %s160
          %s165 = smul.addr %s155, 4
          %s166 = smul.addr %s165, 2
          %s167 = scalar_lea.hbm %s2, %s166
          %s168 = smul.u32 8, %s158
          %s169 = sshll.u32 %s167, 4
          %s170 = int_to_ptr.hbm [resolvable:$true] %s169
          %s171 = sshll.u32 %s154, 4
          %s172 = int_to_ptr.vmem [resolvable:$true] %s171
          %s173 = sshll.u32 %s168, 4
          %177 = dma.hbm_to_vmem [thread:$0]  (%p164), %s170, %s173, %s172, %s151, 128, 128, 8
        $region24: #{tpu_custom_call.1} parent=15 // pred_fallthru
          _
      $region16: #{tpu_custom_call.1} parent=5 // pred_fallthru
        _
      %p178 = scmp.le.s32.totalorder 1, %s19
      %p179 = scmp.lt.s32.totalorder %s19, 4
      %p180 = pnand %p178, %p179
      %p181 = pneg %p180
      // Predicated region
      $region25: #{tpu_custom_call.1} parent=5 // pred_check
        _
      $region26: #{tpu_custom_call.1} parent=5 // pred_check_branch
        %183 = sbr.rel (%p180) target = $region28
      $region27: #{tpu_custom_call.1} parent=5 // pred_region
        %s184 = ssub.s32 %s19, 1
        %s185 = sand.u32 %s32, 1
        %s186 = scalar_lea.sflag [#allocation5], %s185
        %s187 = sand.u32 %s32, 1
        %s188 = smul.addr %s187, 256
        %s189 = scalar_lea.vmem [#allocation4], %s188
        // Predicated region
        $region29: #{tpu_custom_call.1} parent=27 // pred_check
          %p190 = pneg %p45
        $region30: #{tpu_custom_call.1} parent=27 // pred_check_branch
          %192 = sbr.rel (%p190) target = $region32
        $region31: #{tpu_custom_call.1} parent=27 // pred_region
          %194 = dma.done %s186, 4096
        $region32: #{tpu_custom_call.1} parent=27 // pred_fallthru
          _
        %s195 = sand.u32 %s58, 1
        %s196 = scalar_lea.sflag [#allocation8], %s195
        %s197 = sand.u32 %s58, 1
        %s198 = smul.addr %s197, 64
        %s199 = scalar_lea.vmem [#allocation7], %s198
        // Predicated region
        $region33: #{tpu_custom_call.1} parent=27 // pred_check
          %p200 = pneg %p71
        $region34: #{tpu_custom_call.1} parent=27 // pred_check_branch
          %202 = sbr.rel (%p200) target = $region36
        $region35: #{tpu_custom_call.1} parent=27 // pred_region
          %204 = dma.done %s196, 1024
        $region36: #{tpu_custom_call.1} parent=27 // pred_fallthru
          _
        %s205 = sand.u32 %s32, 1
        %s206 = scalar_lea.sflag [#allocation5], %s205
        %s207 = sand.u32 %s32, 1
        %s208 = smul.addr %s207, 256
        %s209 = scalar_lea.vmem [#allocation4], %s208
        %p210 = pneg %p45
        %p211 = pneg %p42
        %s212 = sand.u32 %s58, 1
        %s213 = scalar_lea.sflag [#allocation8], %s212
        %s214 = sand.u32 %s58, 1
        %s215 = smul.addr %s214, 64
        %s216 = scalar_lea.vmem [#allocation7], %s215
        %p217 = pneg %p71
        %p218 = pneg %p68
        %p219 = pneg %p97
        %p220 = pneg %p94
        %s221 = sand.u32 %s84, 1
        %s222 = scalar_lea.sflag [#allocation6], %s221
        %s223 = sand.u32 %s84, 1
        %s224 = smul.addr %s223, 256
        %s225 = scalar_lea.vmem [#allocation9], %s224
        %s226 = smul.u32 8, %s24
        %s227 = ssub.s32 18, %s226
        %p228 = scmp.lt.s32.totalorder %s227, 8
        %s229 = scalar_select %p228, %s227, 8
        %s230 = smul.u32 8, %s229
        %s231 = smul.u32 %s230, 4
        %s232 = smul.u32 8, %s24
        %s233 = ssub.s32 18, %s232
        %p234 = scmp.lt.s32.totalorder %s233, 8
        %s235 = scalar_select %p234, %s233, 8
        %s236 = smul.u32 2, %s235
        %s237 = smul.u32 %s236, 4
        %s238 = smul.u32 8, %s24
        %s239 = ssub.s32 18, %s238
        %p240 = scmp.lt.s32.totalorder %s239, 8
        %s241 = scalar_select %p240, %s239, 8
        %s242 = smul.u32 8, %s241
        %s243 = smul.u32 %s242, 4
        %s244 = sld [smem:[#allocation3]]
        %v245 = vld [vmem:[%s199] sm:$0xff]
        %v246 = vld [vmem:[%s199 + $0x8] sm:$0xff]
        %v247 = vld [vmem:[%s199 + $0x10] sm:$0xff]
        %v248 = vld [vmem:[%s199 + $0x18] sm:$0xff]
        %v249 = vld [vmem:[%s199 + $0x20] sm:$0xff]
        %v250 = vld [vmem:[%s199 + $0x28] sm:$0xff]
        %v251 = vld [vmem:[%s199 + $0x30] sm:$0xff]
        %v252 = vld [vmem:[%s199 + $0x38] sm:$0xff]
        %v253 = vunpack.c.0.s8 %v245
        %v254 = vunpack.c.1.s8 %v245
        %v255 = vunpack.c.2.s8 %v245
        %v256 = vunpack.c.3.s8 %v245
        %v257 = vunpack.c.0.s8 %v246
        %v258 = vunpack.c.1.s8 %v246
        %v259 = vunpack.c.2.s8 %v246
        %v260 = vunpack.c.3.s8 %v246
        %v261 = vunpack.c.0.s8 %v247
        %v262 = vunpack.c.1.s8 %v247
        %v263 = vunpack.c.2.s8 %v247
        %v264 = vunpack.c.3.s8 %v247
        %v265 = vunpack.c.0.s8 %v248
        %v266 = vunpack.c.1.s8 %v248
        %v267 = vunpack.c.2.s8 %v248
        %v268 = vunpack.c.3.s8 %v248
        %v269 = vunpack.c.0.s8 %v249
        %v270 = vunpack.c.1.s8 %v249
        %v271 = vunpack.c.2.s8 %v249
        %v272 = vunpack.c.3.s8 %v249
        %v273 = vunpack.c.0.s8 %v250
        %v274 = vunpack.c.1.s8 %v250
        %v275 = vunpack.c.2.s8 %v250
        %v276 = vunpack.c.3.s8 %v250
        %v277 = vunpack.c.0.s8 %v251
        %v278 = vunpack.c.1.s8 %v251
        %v279 = vunpack.c.2.s8 %v251
        %v280 = vunpack.c.3.s8 %v251
        %v281 = vunpack.c.0.s8 %v252
        %v282 = vunpack.c.1.s8 %v252
        %v283 = vunpack.c.2.s8 %v252
        %v284 = vunpack.c.3.s8 %v252
        %v285 = vand.u32 %v253, 255
        %v286 = vand.u32 %v254, 255
        %v287 = vand.u32 %v255, 255
        %v288 = vand.u32 %v256, 255
        %v289 = vand.u32 %v257, 255
        %v290 = vand.u32 %v258, 255
        %v291 = vand.u32 %v259, 255
        %v292 = vand.u32 %v260, 255
        %v293 = vand.u32 %v261, 255
        %v294 = vand.u32 %v262, 255
        %v295 = vand.u32 %v263, 255
        %v296 = vand.u32 %v264, 255
        %v297 = vand.u32 %v265, 255
        %v298 = vand.u32 %v266, 255
        %v299 = vand.u32 %v267, 255
        %v300 = vand.u32 %v268, 255
        %v301 = vand.u32 %v269, 255
        %v302 = vand.u32 %v270, 255
        %v303 = vand.u32 %v271, 255
        %v304 = vand.u32 %v272, 255
        %v305 = vand.u32 %v273, 255
        %v306 = vand.u32 %v274, 255
        %v307 = vand.u32 %v275, 255
        %v308 = vand.u32 %v276, 255
        %v309 = vand.u32 %v277, 255
        %v310 = vand.u32 %v278, 255
        %v311 = vand.u32 %v279, 255
        %v312 = vand.u32 %v280, 255
        %v313 = vand.u32 %v281, 255
        %v314 = vand.u32 %v282, 255
        %v315 = vand.u32 %v283, 255
        %v316 = vand.u32 %v284, 255
        %v317 = vstv %s244
        %vm318 = vcmp.le.s32.totalorder %v285, %v317
        %vm319 = vcmp.le.s32.totalorder %v286, %v317
        %vm320 = vcmp.le.s32.totalorder %v287, %v317
        %vm321 = vcmp.le.s32.totalorder %v288, %v317
        %vm322 = vcmp.le.s32.totalorder %v289, %v317
        %vm323 = vcmp.le.s32.totalorder %v290, %v317
        %vm324 = vcmp.le.s32.totalorder %v291, %v317
        %vm325 = vcmp.le.s32.totalorder %v292, %v317
        %vm326 = vcmp.le.s32.totalorder %v293, %v317
        %vm327 = vcmp.le.s32.totalorder %v294, %v317
        %vm328 = vcmp.le.s32.totalorder %v295, %v317
        %vm329 = vcmp.le.s32.totalorder %v296, %v317
        %vm330 = vcmp.le.s32.totalorder %v297, %v317
        %vm331 = vcmp.le.s32.totalorder %v298, %v317
        %vm332 = vcmp.le.s32.totalorder %v299, %v317
        %vm333 = vcmp.le.s32.totalorder %v300, %v317
        %vm334 = vcmp.le.s32.totalorder %v301, %v317
        %vm335 = vcmp.le.s32.totalorder %v302, %v317
        %vm336 = vcmp.le.s32.totalorder %v303, %v317
        %vm337 = vcmp.le.s32.totalorder %v304, %v317
        %vm338 = vcmp.le.s32.totalorder %v305, %v317
        %vm339 = vcmp.le.s32.totalorder %v306, %v317
        %vm340 = vcmp.le.s32.totalorder %v307, %v317
        %vm341 = vcmp.le.s32.totalorder %v308, %v317
        %vm342 = vcmp.le.s32.totalorder %v309, %v317
        %vm343 = vcmp.le.s32.totalorder %v310, %v317
        %vm344 = vcmp.le.s32.totalorder %v311, %v317
        %vm345 = vcmp.le.s32.totalorder %v312, %v317
        %vm346 = vcmp.le.s32.totalorder %v313, %v317
        %vm347 = vcmp.le.s32.totalorder %v314, %v317
        %vm348 = vcmp.le.s32.totalorder %v315, %v317
        %vm349 = vcmp.le.s32.totalorder %v316, %v317
        %v350 = vld [vmem:[%s189] sm:$0xff]
        %v351 = vld [vmem:[%s189 + $0x8] sm:$0xff]
        %v352 = vld [vmem:[%s189 + $0x10] sm:$0xff]
        %v353 = vld [vmem:[%s189 + $0x18] sm:$0xff]
        %v354 = vld [vmem:[%s189 + $0x20] sm:$0xff]
        %v355 = vld [vmem:[%s189 + $0x28] sm:$0xff]
        %v356 = vld [vmem:[%s189 + $0x30] sm:$0xff]
        %v357 = vld [vmem:[%s189 + $0x38] sm:$0xff]
        %v358 = vld [vmem:[%s189 + $0x40] sm:$0xff]
        %v359 = vld [vmem:[%s189 + $0x48] sm:$0xff]
        %v360 = vld [vmem:[%s189 + $0x50] sm:$0xff]
        %v361 = vld [vmem:[%s189 + $0x58] sm:$0xff]
        %v362 = vld [vmem:[%s189 + $0x60] sm:$0xff]
        %v363 = vld [vmem:[%s189 + $0x68] sm:$0xff]
        %v364 = vld [vmem:[%s189 + $0x70] sm:$0xff]
        %v365 = vld [vmem:[%s189 + $0x78] sm:$0xff]
        %v366 = vld [vmem:[%s189 + $0x80] sm:$0xff]
        %v367 = vld [vmem:[%s189 + $0x88] sm:$0xff]
        %v368 = vld [vmem:[%s189 + $0x90] sm:$0xff]
        %v369 = vld [vmem:[%s189 + $0x98] sm:$0xff]
        %v370 = vld [vmem:[%s189 + $0xa0] sm:$0xff]
        %v371 = vld [vmem:[%s189 + $0xa8] sm:$0xff]
        %v372 = vld [vmem:[%s189 + $0xb0] sm:$0xff]
        %v373 = vld [vmem:[%s189 + $0xb8] sm:$0xff]
        %v374 = vld [vmem:[%s189 + $0xc0] sm:$0xff]
        %v375 = vld [vmem:[%s189 + $0xc8] sm:$0xff]
        %v376 = vld [vmem:[%s189 + $0xd0] sm:$0xff]
        %v377 = vld [vmem:[%s189 + $0xd8] sm:$0xff]
        %v378 = vld [vmem:[%s189 + $0xe0] sm:$0xff]
        %v379 = vld [vmem:[%s189 + $0xe8] sm:$0xff]
        %v380 = vld [vmem:[%s189 + $0xf0] sm:$0xff]
        %v381 = vld [vmem:[%s189 + $0xf8] sm:$0xff]
        %v382 = vsel %vm318, 1, 0
        %v383 = vsel %vm319, 1, 0
        %v384 = vsel %vm320, 1, 0
        %v385 = vsel %vm321, 1, 0
        %v386 = vsel %vm322, 1, 0
        %v387 = vsel %vm323, 1, 0
        %v388 = vsel %vm324, 1, 0
        %v389 = vsel %vm325, 1, 0
        %v390 = vsel %vm326, 1, 0
        %v391 = vsel %vm327, 1, 0
        %v392 = vsel %vm328, 1, 0
        %v393 = vsel %vm329, 1, 0
        %v394 = vsel %vm330, 1, 0
        %v395 = vsel %vm331, 1, 0
        %v396 = vsel %vm332, 1, 0
        %v397 = vsel %vm333, 1, 0
        %v398 = vsel %vm334, 1, 0
        %v399 = vsel %vm335, 1, 0
        %v400 = vsel %vm336, 1, 0
        %v401 = vsel %vm337, 1, 0
        %v402 = vsel %vm338, 1, 0
        %v403 = vsel %vm339, 1, 0
        %v404 = vsel %vm340, 1, 0
        %v405 = vsel %vm341, 1, 0
        %v406 = vsel %vm342, 1, 0
        %v407 = vsel %vm343, 1, 0
        %v408 = vsel %vm344, 1, 0
        %v409 = vsel %vm345, 1, 0
        %v410 = vsel %vm346, 1, 0
        %v411 = vsel %vm347, 1, 0
        %v412 = vsel %vm348, 1, 0
        %v413 = vsel %vm349, 1, 0
        %v414 = vcvt.s32.f32 %v382
        %v415 = vcvt.s32.f32 %v383
        %v416 = vcvt.s32.f32 %v384
        %v417 = vcvt.s32.f32 %v385
        %v418 = vcvt.s32.f32 %v386
        %v419 = vcvt.s32.f32 %v387
        %v420 = vcvt.s32.f32 %v388
        %v421 = vcvt.s32.f32 %v389
        %v422 = vcvt.s32.f32 %v390
        %v423 = vcvt.s32.f32 %v391
        %v424 = vcvt.s32.f32 %v392
        %v425 = vcvt.s32.f32 %v393
        %v426 = vcvt.s32.f32 %v394
        %v427 = vcvt.s32.f32 %v395
        %v428 = vcvt.s32.f32 %v396
        %v429 = vcvt.s32.f32 %v397
        %v430 = vcvt.s32.f32 %v398
        %v431 = vcvt.s32.f32 %v399
        %v432 = vcvt.s32.f32 %v400
        %v433 = vcvt.s32.f32 %v401
        %v434 = vcvt.s32.f32 %v402
        %v435 = vcvt.s32.f32 %v403
        %v436 = vcvt.s32.f32 %v404
        %v437 = vcvt.s32.f32 %v405
        %v438 = vcvt.s32.f32 %v406
        %v439 = vcvt.s32.f32 %v407
        %v440 = vcvt.s32.f32 %v408
        %v441 = vcvt.s32.f32 %v409
        %v442 = vcvt.s32.f32 %v410
        %v443 = vcvt.s32.f32 %v411
        %v444 = vcvt.s32.f32 %v412
        %v445 = vcvt.s32.f32 %v413
        %v446 = vmul.f32 %v350, %v414
        %v447 = vmul.f32 %v351, %v415
        %v448 = vmul.f32 %v352, %v416
        %v449 = vmul.f32 %v353, %v417
        %v450 = vmul.f32 %v354, %v418
        %v451 = vmul.f32 %v355, %v419
        %v452 = vmul.f32 %v356, %v420
        %v453 = vmul.f32 %v357, %v421
        %v454 = vmul.f32 %v358, %v422
        %v455 = vmul.f32 %v359, %v423
        %v456 = vmul.f32 %v360, %v424
        %v457 = vmul.f32 %v361, %v425
        %v458 = vmul.f32 %v362, %v426
        %v459 = vmul.f32 %v363, %v427
        %v460 = vmul.f32 %v364, %v428
        %v461 = vmul.f32 %v365, %v429
        %v462 = vmul.f32 %v366, %v430
        %v463 = vmul.f32 %v367, %v431
        %v464 = vmul.f32 %v368, %v432
        %v465 = vmul.f32 %v369, %v433
        %v466 = vmul.f32 %v370, %v434
        %v467 = vmul.f32 %v371, %v435
        %v468 = vmul.f32 %v372, %v436
        %v469 = vmul.f32 %v373, %v437
        %v470 = vmul.f32 %v374, %v438
        %v471 = vmul.f32 %v375, %v439
        %v472 = vmul.f32 %v376, %v440
        %v473 = vmul.f32 %v377, %v441
        %v474 = vmul.f32 %v378, %v442
        %v475 = vmul.f32 %v379, %v443
        %v476 = vmul.f32 %v380, %v444
        %v477 = vmul.f32 %v381, %v445
        %478 = vst [vmem:[%s225] sm:$0xff] %v446
        %479 = vst [vmem:[%s225 + $0x8] sm:$0xff] %v447
        %480 = vst [vmem:[%s225 + $0x10] sm:$0xff] %v448
        %481 = vst [vmem:[%s225 + $0x18] sm:$0xff] %v449
        %482 = vst [vmem:[%s225 + $0x20] sm:$0xff] %v450
        %483 = vst [vmem:[%s225 + $0x28] sm:$0xff] %v451
        %484 = vst [vmem:[%s225 + $0x30] sm:$0xff] %v452
        %485 = vst [vmem:[%s225 + $0x38] sm:$0xff] %v453
        %486 = vst [vmem:[%s225 + $0x40] sm:$0xff] %v454
        %487 = vst [vmem:[%s225 + $0x48] sm:$0xff] %v455
        %488 = vst [vmem:[%s225 + $0x50] sm:$0xff] %v456
        %489 = vst [vmem:[%s225 + $0x58] sm:$0xff] %v457
        %490 = vst [vmem:[%s225 + $0x60] sm:$0xff] %v458
        %491 = vst [vmem:[%s225 + $0x68] sm:$0xff] %v459
        %492 = vst [vmem:[%s225 + $0x70] sm:$0xff] %v460
        %493 = vst [vmem:[%s225 + $0x78] sm:$0xff] %v461
        %494 = vst [vmem:[%s225 + $0x80] sm:$0xff] %v462
        %495 = vst [vmem:[%s225 + $0x88] sm:$0xff] %v463
        %496 = vst [vmem:[%s225 + $0x90] sm:$0xff] %v464
        %497 = vst [vmem:[%s225 + $0x98] sm:$0xff] %v465
        %498 = vst [vmem:[%s225 + $0xa0] sm:$0xff] %v466
        %499 = vst [vmem:[%s225 + $0xa8] sm:$0xff] %v467
        %500 = vst [vmem:[%s225 + $0xb0] sm:$0xff] %v468
        %501 = vst [vmem:[%s225 + $0xb8] sm:$0xff] %v469
        %502 = vst [vmem:[%s225 + $0xc0] sm:$0xff] %v470
        %503 = vst [vmem:[%s225 + $0xc8] sm:$0xff] %v471
        %504 = vst [vmem:[%s225 + $0xd0] sm:$0xff] %v472
        %505 = vst [vmem:[%s225 + $0xd8] sm:$0xff] %v473
        %506 = vst [vmem:[%s225 + $0xe0] sm:$0xff] %v474
        %507 = vst [vmem:[%s225 + $0xe8] sm:$0xff] %v475
        %508 = vst [vmem:[%s225 + $0xf0] sm:$0xff] %v476
        %509 = vst [vmem:[%s225 + $0xf8] sm:$0xff] %v477
        %s510 = sand.u32 %s84, 1
        %s511 = scalar_lea.sflag [#allocation6], %s510
        %s512 = sand.u32 %s84, 1
        %s513 = smul.addr %s512, 256
        %s514 = scalar_lea.vmem [#allocation9], %s513
        // Predicated region
        $region37: #{tpu_custom_call.1} parent=27 // pred_check
          %p515 = pneg %p94
        $region38: #{tpu_custom_call.1} parent=27 // pred_check_branch
          %517 = sbr.rel (%p515) target = $region40
        $region39: #{tpu_custom_call.1} parent=27 // pred_region
          %s518 = smul.u32 8, %s24
          %s519 = ssub.s32 18, %s518
          %p520 = scmp.lt.s32.totalorder %s519, 8
          %s521 = scalar_select %p520, %s519, 8
          %s522 = smul.u32 8, %s521
          %s523 = smul.u32 %s522, 4
          %s524 = ssub.s32 256, %s523
          %s525 = sshll.u32 %s524, 4
          %526 = vsyncadd %s511, %s525
          %p527 = scmp.ne.s32.totalorder 0, %s523
          %s528 = smul.addr %s518, 4
          %s529 = smul.addr %s528, 8
          %s530 = scalar_lea.hbm %s3, %s529
          %s531 = smul.u32 32, %s521
          %s532 = sshll.u32 %s514, 4
          %s533 = int_to_ptr.vmem [resolvable:$true] %s532
          %s534 = sshll.u32 %s530, 4
          %s535 = int_to_ptr.hbm [resolvable:$true] %s534
          %s536 = sshll.u32 %s531, 4
          %540 = dma.vmem_to_hbm [thread:$0]  (%p527), %s533, %s536, %s535, %s511, 512, 512, 32
        $region40: #{tpu_custom_call.1} parent=27 // pred_fallthru
          _
      $region28: #{tpu_custom_call.1} parent=5 // pred_fallthru
        _
      %p541 = scmp.le.s32.totalorder 2, %s19
      // Predicated region
      $region41: #{tpu_custom_call.1} parent=5 // pred_check
        %p542 = pneg %p541
      $region42: #{tpu_custom_call.1} parent=5 // pred_check_branch
        %544 = sbr.rel (%p542) target = $region44
      $region43: #{tpu_custom_call.1} parent=5 // pred_region
        %s545 = ssub.s32 %s19, 2
        // Predicated region
        $region45: #{tpu_custom_call.1} parent=43 // pred_check
          %p546 = pneg %p100
        $region46: #{tpu_custom_call.1} parent=43 // pred_check_branch
          %548 = sbr.rel (%p546) target = $region48
        $region47: #{tpu_custom_call.1} parent=43 // pred_region
          %s549 = sand.u32 %s85, 1
          %s550 = scalar_lea.sflag [#allocation6], %s549
          %s551 = sand.u32 %s85, 1
          %s552 = smul.addr %s551, 256
          %s553 = scalar_lea.vmem [#allocation9], %s552
          %555 = dma.done %s550, 4096
        $region48: #{tpu_custom_call.1} parent=43 // pred_fallthru
          _
      $region44: #{tpu_custom_call.1} parent=5 // pred_fallthru
        _
    $region6: #{tpu_custom_call.1} parent=1 // loop_footer
      %s23 = sadd.s32 1, %s19
    $region7: #{tpu_custom_call.1} parent=1 // loop_footer_branch
      %18 = sbr.rel target = $region3
    $region8: #{tpu_custom_call.1} parent=1 // loop_exit
      _
    %556 = vsyncpa [#allocation5], 1
    %s557 = scalar_lea.sflag [#allocation5], 1
    %558 = vsyncpa %s557, 1
    %559 = vsyncpa [#allocation8], 1
    %s560 = scalar_lea.sflag [#allocation8], 1
    %561 = vsyncpa %s560, 1
    %562 = vsyncpa [#allocation6], 1
    %s563 = scalar_lea.sflag [#allocation6], 1
    %564 = vsyncpa %s563, 1

</llo_original>
